<compile_context>
chip_gen: v7x
topology: tpu7x:2x2x1
jax: 0.10.0
libtpu: 0.0.40
codegen_flags: <defaults>
</compile_context>

<pallas_src>
import functools

import jax
import jax.numpy as jnp
from jax import lax
from jax.experimental import pallas as pl
from jax.experimental.pallas import tpu as pltpu


# ----------------------------------------------------------------------------
# helpers
# ----------------------------------------------------------------------------
def _round_up(x, m):
    return ((x + m - 1) // m) * m


def _pick_tm(n, with_re, cap_bytes=20 * 1024 * 1024):
    """Row tile for the hete-prop kernels, sized so per-step (TM, N) temporaries
    stay well under the 32 MiB default scoped VMEM (safe on v7x's 64 MiB too)."""
    tm = min(256, _round_up(n, 8))
    while tm > 8:
        n_pad = _round_up(n, tm)
        per_step = 9 * tm * n_pad * 4            # re/lr/sig/concat/iota temporaries
        if with_re:
            per_step += 2 * tm * n_pad * 4       # double-buffered universal_re tile
        if per_step <= cap_bytes:
            break
        tm = max(8, _round_up(tm // 2, 8))
    return tm


# ----------------------------------------------------------------------------
# Kernel 1: fused MLP branch   y = W_L(...prelu(W_0 x + b_0)...) + b_L
#           (one pallas_call per branch, row-tiled, weights resident)
# ----------------------------------------------------------------------------
def _fused_mlp_kernel(*refs, n_layers):
    alpha_ref = refs[0]                    # (1, 1)
    x_ref = refs[1]                        # (TM, in_dim)
    wb = refs[2:2 + 2 * n_layers]          # w0, b0, w1, b1, ...
    o_ref = refs[-1]                       # (TM, out_dim)

    alpha = alpha_ref[...]                 # (1, 1), broadcasts
    x = x_ref[...].astype(jnp.float32)
    for l in range(n_layers):
        w = wb[2 * l][...]
        b = wb[2 * l + 1][...]
        x = jnp.dot(x, w, preferred_element_type=jnp.float32) + b
        if l < n_layers - 1:
            x = jnp.where(x > 0, x, alpha * x)     # PReLU
            # TODO(synk): dropout is stochastic at train time; identity here (eval).
    o_ref[...] = x.astype(o_ref.dtype)


def fused_mlp(x, layers, alpha):
    """layers: list of (w (in, out), b (out,)). PReLU(alpha) between layers."""
    n, in_dim = x.shape
    out_dim = layers[-1][0].shape[1]
    tm = min(512, _round_up(n, 8))
    grid = (pl.cdiv(n, tm),)

    alpha_arr = jnp.full((1, 1), alpha, jnp.float32)
    args = [alpha_arr, x]
    in_specs = [
        pl.BlockSpec((1, 1), lambda i: (0, 0)),
        pl.BlockSpec((tm, in_dim), lambda i: (i, 0)),
    ]
    for w, b in layers:
        b2 = b.reshape(1, -1)
        args += [w, b2]
        in_specs += [
            pl.BlockSpec(w.shape, lambda i: (0, 0)),      # resident
            pl.BlockSpec(b2.shape, lambda i: (0, 0)),     # resident
        ]

    kernel = functools.partial(_fused_mlp_kernel, n_layers=len(layers))
    return pl.pallas_call(
        kernel,
        out_shape=jax.ShapeDtypeStruct((n, out_dim), jnp.float32),
        grid=grid,
        in_specs=in_specs,
        out_specs=pl.BlockSpec((tm, out_dim), lambda i: (i, 0)),
        compiler_params=pltpu.CompilerParams(dimension_semantics=("parallel",)),
    )(*args)


# ----------------------------------------------------------------------------
# Kernel 2: prep for getre_scale.
#   sm   = softmax(emb, axis=1)
#   diag(sm @ sm.T)_i = sum_k sm_ik^2   (row-wise self dot product)
#   sm_n = sm * rsqrt(diag)   so that   sm_n @ sm_n.T == re / sqrt(d_i d_j)
# ----------------------------------------------------------------------------
def _prep_kernel(emb_ref, o_ref):
    x = emb_ref[...].astype(jnp.float32)
    m = jnp.max(x, axis=1, keepdims=True)
    e = jnp.exp(x - m)
    sm = e / jnp.sum(e, axis=1, keepdims=True)
    sd = jnp.sum(sm * sm, axis=1, keepdims=True)          # diag(sm @ sm.T)
    # sd >= 1/D > 1e-9 always, so the torch max(sqrt(.),1e-9) clamp never binds.
    o_ref[...] = (sm * lax.rsqrt(jnp.maximum(sd, 1e-18))).astype(o_ref.dtype)


def _prep_call(feature_emb):
    n, d = feature_emb.shape
    return pl.pallas_call(
        _prep_kernel,
        out_shape=jax.ShapeDtypeStruct((n, d), jnp.float32),
        grid=(1,),
        in_specs=[pl.BlockSpec((n, d), lambda i: (0, 0))],
        out_specs=pl.BlockSpec((n, d), lambda i: (0, 0)),
    )(feature_emb)


# ----------------------------------------------------------------------------
# Kernel 3 (pass 1): global mean / max of the mixed relation matrix, row-tiled.
# ----------------------------------------------------------------------------
def _hete_stats_kernel(*refs, n_real, tm, with_re):
    if with_re:
        sm_ref, re_u_ref, scal_ref, stats_ref, sum_acc, max_acc = refs
    else:
        sm_ref, stats_ref, sum_acc, max_acc = refs

    i = pl.program_id(0)
    n_pad = sm_ref.shape[0]
    row0 = pl.multiple_of(i * tm, tm)

    sm_all = sm_ref[...]
    sm_blk = sm_ref[pl.ds(row0, tm), :]
    # re_block = (sm_n_blk @ sm_n_all.T)  == scaled relation rows (bf16 MXU, f32 acc)
    re = lax.dot_general(sm_blk.astype(jnp.bfloat16), sm_all.astype(jnp.bfloat16),
                         (((1,), (1,)), ((), ())),
                         preferred_element_type=jnp.float32)          # (TM, N_pad)

    rows_g = lax.broadcasted_iota(jnp.int32, (tm, n_pad), 0) + row0
    cols = lax.broadcasted_iota(jnp.int32, (tm, n_pad), 1)
    re = jnp.where(rows_g == cols, 0.0, re)                           # zero diagonal

    if with_re:
        beta = scal_ref[0:1, 1:2]                                     # (1, 1)
        lr = beta * re_u_ref[...] + (1.0 - beta) * re
    else:
        lr = re

    if n_pad == n_real:
        sum_src, max_src = lr, lr
    else:
        valid = (rows_g < n_real) & (cols < n_real)
        sum_src = jnp.where(valid, lr, 0.0)
        max_src = jnp.where(valid, lr, -jnp.inf)

    blk_sum = jnp.sum(jnp.sum(sum_src, axis=1, keepdims=True), axis=0, keepdims=True)
    blk_max = jnp.max(jnp.max(max_src, axis=1, keepdims=True), axis=0, keepdims=True)

    @pl.when(i == 0)
    def _():
        sum_acc[...] = jnp.zeros((1, 1), jnp.float32)
        max_acc[...] = jnp.full((1, 1), -jnp.inf, jnp.float32)

    sum_acc[...] += blk_sum
    max_acc[...] = jnp.maximum(max_acc[...], blk_max)

    @pl.when(i == pl.num_programs(0) - 1)
    def _():
        mean = sum_acc[...] / float(n_real * n_real)
        stats_ref[...] = jnp.concatenate([mean, max_acc[...]], axis=1)


def _hete_stats_call(sm_p, re_p, scal, *, n_real, tm, with_re):
    n_pad, d = sm_p.shape
    grid = (n_pad // tm,)
    in_specs = [pl.BlockSpec((n_pad, d), lambda i: (0, 0))]
    args = [sm_p]
    if with_re:
        in_specs.append(pl.BlockSpec((tm, n_pad), lambda i: (i, 0)))
        args.append(re_p)
        in_specs.append(pl.BlockSpec((1, 2), lambda i: (0, 0)))
        args.append(scal)
    kernel = functools.partial(_hete_stats_kernel, n_real=n_real, tm=tm, with_re=with_re)
    return pl.pallas_call(
        kernel,
        out_shape=jax.ShapeDtypeStruct((1, 2), jnp.float32),           # [mean, max]
        grid=grid,
        in_specs=in_specs,
        out_specs=pl.BlockSpec((1, 2), lambda i: (0, 0)),
        scratch_shapes=[pltpu.VMEM((1, 1), jnp.float32),
                        pltpu.VMEM((1, 1), jnp.float32)],
        compiler_params=pltpu.CompilerParams(dimension_semantics=("arbitrary",)),
    )(*args)


# ----------------------------------------------------------------------------
# Kernel 4 (pass 2): rescale -> +I -> PReLU(+/-) -> fused [pos;neg] @ emb
#                    -> row softmax -> combine.   Row-tiled, "parallel".
# ----------------------------------------------------------------------------
def _hete_prop_kernel(*refs, tm, with_re):
    if with_re:
        emb_ref, sm_ref, re_u_ref, stats_ref, scal_ref, o_ref = refs
    else:
        emb_ref, sm_ref, stats_ref, scal_ref, o_ref = refs

    i = pl.program_id(0)
    n_pad = sm_ref.shape[0]
    row0 = pl.multiple_of(i * tm, tm)

    sm_all = sm_ref[...]
    sm_blk = sm_ref[pl.ds(row0, tm), :]
    emb_all = emb_ref[...]
    emb_blk = emb_ref[pl.ds(row0, tm), :]

    re = lax.dot_general(sm_blk.astype(jnp.bfloat16), sm_all.astype(jnp.bfloat16),
                         (((1,), (1,)), ((), ())),
                         preferred_element_type=jnp.float32)           # (TM, N_pad)

    rows_g = lax.broadcasted_iota(jnp.int32, (tm, n_pad), 0) + row0
    cols = lax.broadcasted_iota(jnp.int32, (tm, n_pad), 1)
    diag = rows_g == cols
    re = jnp.where(diag, 0.0, re)

    if with_re:
        beta = scal_ref[0:1, 1:2]
        lr = beta * re_u_ref[...] + (1.0 - beta) * re
    else:
        lr = re

    mean = stats_ref[0:1, 0:1]
    mx = stats_ref[0:1, 1:2]
    # (reciprocal multiplies instead of full-rate NxN divides; same no-eps
    #  semantics as torch: degenerate mean==0 / max==mean still yields inf/nan)
    inv_pos = 1.0 / (mx - mean)
    inv_neg = 1.0 / mean
    shifted = lr - mean
    lr = jnp.where(shifted > 0, shifted * inv_pos, -(lr * inv_neg))
    lr = jnp.where(diag, lr + 1.0, lr)                                 # add_diag == +I

    alpha = scal_ref[0:1, 0:1]
    pos_sig = jnp.where(lr > 0, lr, alpha * lr)                        # PReLU(lr)
    neg_lr = -lr
    neg_sig = jnp.where(neg_lr > 0, neg_lr, alpha * neg_lr)            # PReLU(-lr)

    # one MXU pass for both signals: shared RHS (emb), doubled LHS rows
    cat = jnp.concatenate([pos_sig, neg_sig], axis=0).astype(jnp.bfloat16)
    prod = jnp.dot(cat, emb_all.astype(jnp.bfloat16),
                   preferred_element_type=jnp.float32)                 # (2*TM, D)

    def _rsoft(x):
        m = jnp.max(x, axis=1, keepdims=True)
        e = jnp.exp(x - m)
        s = jnp.sum(e, axis=1, keepdims=True)
        return e * pl.reciprocal(s, approx=True)

    p_pos = _rsoft(prod[:tm])
    p_neg = _rsoft(prod[tm:])
    o_ref[...] = ((p_pos - p_neg + emb_blk) * 0.5).astype(o_ref.dtype)


def _hete_prop_call(emb_p, sm_p, re_p, stats, scal, *, tm, with_re):
    n_pad, d = emb_p.shape
    grid = (n_pad // tm,)
    in_specs = [pl.BlockSpec((n_pad, d), lambda i: (0, 0)),            # emb (resident)
                pl.BlockSpec((n_pad, d), lambda i: (0, 0))]            # sm_n (resident)
    args = [emb_p, sm_p]
    if with_re:
        in_specs.append(pl.BlockSpec((tm, n_pad), lambda i: (i, 0)))
        args.append(re_p)
    in_specs.append(pl.BlockSpec((1, 2), lambda i: (0, 0)))            # [mean, max]
    args.append(stats)
    in_specs.append(pl.BlockSpec((1, 2), lambda i: (0, 0)))            # [alpha, beta]
    args.append(scal)
    kernel = functools.partial(_hete_prop_kernel, tm=tm, with_re=with_re)
    return pl.pallas_call(
        kernel,
        out_shape=jax.ShapeDtypeStruct((n_pad, d), jnp.float32),
        grid=grid,
        in_specs=in_specs,
        out_specs=pl.BlockSpec((tm, d), lambda i: (i, 0)),
        compiler_params=pltpu.CompilerParams(dimension_semantics=("parallel",)),
    )(*args)


def hete_propagate(feature_emb, universal_re=None, *, alpha=0.25, beta=0.0):
    """Full HetePropagateLayer tail: getre_scale -> mix -> rescale -> +I ->
    PReLU(+/-) -> propagation -> softmax -> combine."""
    n, d = feature_emb.shape
    # TODO(synk): beta must be a Python float; beta == 0.0 (module default) skips
    # the NxN universal_re DMA entirely.
    with_re = float(beta) != 0.0

    sm_n = _prep_call(feature_emb)

    tm = _pick_tm(n, with_re)
    n_pad = _round_up(n, tm)
    pad = n_pad - n
    emb_p = jnp.pad(feature_emb, ((0, pad), (0, 0))) if pad else feature_emb
    sm_p = jnp.pad(sm_n, ((0, pad), (0, 0))) if pad else sm_n
    re_p = None
    if with_re:
        re_u = universal_re.astype(jnp.float32)
        re_p = jnp.pad(re_u, ((0, pad), (0, pad))) if pad else re_u

    scal = jnp.array([[alpha, beta]], jnp.float32)                     # (1, 2)

    stats = _hete_stats_call(sm_p, re_p, scal, n_real=n, tm=tm, with_re=with_re)
    out_p = _hete_prop_call(emb_p, sm_p, re_p, stats, scal, tm=tm, with_re=with_re)
    return out_p[:n] if pad else out_p


# ----------------------------------------------------------------------------
# Parameter construction (deterministic xavier_uniform, gain = sqrt(2), zero bias)
# ----------------------------------------------------------------------------
def _xavier_uniform(key, fan_in, fan_out, gain):
    bound = gain * (6.0 / (fan_in + fan_out)) ** 0.5
    return jax.random.uniform(key, (fan_in, fan_out), jnp.float32, -bound, bound)


def _make_mlp_params(key, dims, gain):
    params = []
    for i in range(len(dims) - 1):
        key, sub = jax.random.split(key)
        w = _xavier_uniform(sub, dims[i], dims[i + 1], gain)
        b = jnp.zeros((dims[i + 1],), jnp.float32)
        params.append((w, b))
    return params, key


def init_params(key, num_layers, feat_dim, hidden_dim, output_dim, prop_steps):
    gain = 2.0 ** 0.5  # nn.init.calculate_gain('relu')
    smooth_dims = [(prop_steps + 1) * feat_dim] + [hidden_dim] * (num_layers - 1) + [output_dim]
    local_dims = [feat_dim] + [hidden_dim] * (num_layers - 1) + [output_dim]
    hete_dims = [(prop_steps + 1) * feat_dim] + [hidden_dim] * (num_layers - 1) + [output_dim]
    smooth, key = _make_mlp_params(key, smooth_dims, gain)
    local, key = _make_mlp_params(key, local_dims, gain)
    hete, key = _make_mlp_params(key, hete_dims, gain)
    return {
        "smooth": smooth,
        "local": local,
        "hete": hete,
        "prelu_model": 0.25,   # PyTorch PReLU default init (HetePropagateModel.prelu)
        "prelu_hete": 0.25,    # HetePropagateLayer.prelu
        "beta": 0.0,           # HetePropagateLayer default
    }


# ----------------------------------------------------------------------------
# Full forward pass of HetePropagateModel
# ----------------------------------------------------------------------------
def model_forward(params, ori_feature, smoothed_feature, processed_feature, universal_re):
    # processed_feature is unused in the reference forward (only moved to device).
    del processed_feature

    local_smooth_emb = fused_mlp(smoothed_feature, params["smooth"], params["prelu_model"])
    local_ori_emb = fused_mlp(ori_feature, params["local"], params["prelu_model"])
    feature_emb = fused_mlp(smoothed_feature, params["hete"], params["prelu_hete"])

    local_message_propagation = hete_propagate(
        feature_emb, universal_re, alpha=params["prelu_hete"], beta=params["beta"])

    return local_ori_emb, local_smooth_emb, local_message_propagation


# ----------------------------------------------------------------------------
if __name__ == "__main__":
    num_layers = 2
    feat_dim = 16
    hidden_dim = 32
    output_dim = 16
    prop_steps = 3
    num_nodes = 64

    key = jax.random.PRNGKey(0)
    kp, k1, k2, k3, k4 = jax.random.split(key, 5)

    params = init_params(kp, num_layers, feat_dim, hidden_dim, output_dim, prop_steps)

    ori_feature = jax.random.normal(k1, (num_nodes, feat_dim), jnp.float32)
    smoothed_feature = jax.random.normal(
        k2, (num_nodes, (prop_steps + 1) * feat_dim), jnp.float32)
    processed_feature = jax.random.normal(k3, (num_nodes, feat_dim), jnp.float32)
    universal_re = jax.random.normal(k4, (num_nodes, num_nodes), jnp.float32)

    # Default module config (beta = 0: universal_re is never loaded).
    outs = jax.block_until_ready(
        model_forward(params, ori_feature, smoothed_feature,
                      processed_feature, universal_re))
    local_ori_emb, local_smooth_emb, local_message_propagation = outs
    assert local_ori_emb.shape == (num_nodes, output_dim)
    assert local_smooth_emb.shape == (num_nodes, output_dim)
    assert local_message_propagation.shape == (num_nodes, output_dim)
    for o in outs:
        assert bool(jnp.all(jnp.isfinite(o)))

    # Also exercise the beta != 0 path (universal_re mixing).
    params_b = dict(params)
    params_b["beta"] = 0.3
    outs_b = jax.block_until_ready(
        model_forward(params_b, ori_feature, smoothed_feature,
                      processed_feature, universal_re))
    assert outs_b[2].shape == (num_nodes, output_dim)
    assert bool(jnp.all(jnp.isfinite(outs_b[2])))

    print("KERNEL_OK")
</pallas_src>

<mosaic_0001>
module attributes {stable_mosaic.version = 11 : i64} {
  func.func @_fused_mlp_kernel(%arg0: i32, %arg1: memref<1x1xf32, #tpu.memory_space<vmem>>, %arg2: memref<64x64xf32, #tpu.memory_space<vmem>>, %arg3: memref<64x32xf32, #tpu.memory_space<vmem>>, %arg4: memref<1x32xf32, #tpu.memory_space<vmem>>, %arg5: memref<32x16xf32, #tpu.memory_space<vmem>>, %arg6: memref<1x16xf32, #tpu.memory_space<vmem>>, %arg7: memref<64x16xf32, #tpu.memory_space<vmem>>) attributes {dimension_semantics = [#tpu.dimension_semantics<parallel>], iteration_bounds = array<i64: 1>, scalar_prefetch = 0 : i64, scratch_operands = 0 : i64, tpu.core_type = #tpu.core_type<tc>, window_params = [{pipeline_mode = #tpu.pipeline_mode<synchronous>, transform_indices = @transform_0, window_bounds = array<i64: 1, 1>}, {transform_indices = @transform_1, window_bounds = array<i64: 64, 64>}, {pipeline_mode = #tpu.pipeline_mode<synchronous>, transform_indices = @transform_2, window_bounds = array<i64: 64, 32>}, {pipeline_mode = #tpu.pipeline_mode<synchronous>, transform_indices = @transform_3, window_bounds = array<i64: 1, 32>}, {pipeline_mode = #tpu.pipeline_mode<synchronous>, transform_indices = @transform_4, window_bounds = array<i64: 32, 16>}, {pipeline_mode = #tpu.pipeline_mode<synchronous>, transform_indices = @transform_5, window_bounds = array<i64: 1, 16>}, {transform_indices = @transform_6, window_bounds = array<i64: 64, 16>}]} {
    %c0 = arith.constant 0 : index
    %c0_0 = arith.constant 0 : index
    %0 = vector.load %arg1[%c0, %c0_0] : memref<1x1xf32, #tpu.memory_space<vmem>>, vector<1x1xf32>
    %c0_1 = arith.constant 0 : index
    %c0_2 = arith.constant 0 : index
    %1 = vector.load %arg2[%c0_1, %c0_2] : memref<64x64xf32, #tpu.memory_space<vmem>>, vector<64x64xf32>
    %c0_3 = arith.constant 0 : index
    %c0_4 = arith.constant 0 : index
    %2 = vector.load %arg3[%c0_3, %c0_4] : memref<64x32xf32, #tpu.memory_space<vmem>>, vector<64x32xf32>
    %c0_5 = arith.constant 0 : index
    %c0_6 = arith.constant 0 : index
    %3 = vector.load %arg4[%c0_5, %c0_6] : memref<1x32xf32, #tpu.memory_space<vmem>>, vector<1x32xf32>
    %cst = arith.constant dense<0.000000e+00> : vector<64x32xf32>
    %4 = tpu.matmul %1, %2, %cst {dimension_numbers = #tpu.dot_dimension_numbers<[1], [0], [0], [1], [0, 0, 1, 1], [], []>} : vector<64x64xf32>, vector<64x32xf32>, vector<64x32xf32> -> vector<64x32xf32>
    %5 = vector.broadcast %3 : vector<1x32xf32> to vector<64x32xf32>
    %6 = arith.addf %4, %5 : vector<64x32xf32>
    %cst_7 = arith.constant 0.000000e+00 : f32
    %7 = vector.broadcast %cst_7 : f32 to vector<64x32xf32>
    %8 = arith.cmpf ogt, %6, %7 : vector<64x32xf32>
    %9 = vector.broadcast %0 : vector<1x1xf32> to vector<64x32xf32>
    %10 = arith.mulf %9, %6 : vector<64x32xf32>
    %11 = arith.select %8, %6, %10 : vector<64x32xi1>, vector<64x32xf32>
    %c0_8 = arith.constant 0 : index
    %c0_9 = arith.constant 0 : index
    %12 = vector.load %arg5[%c0_8, %c0_9] : memref<32x16xf32, #tpu.memory_space<vmem>>, vector<32x16xf32>
    %c0_10 = arith.constant 0 : index
    %c0_11 = arith.constant 0 : index
    %13 = vector.load %arg6[%c0_10, %c0_11] : memref<1x16xf32, #tpu.memory_space<vmem>>, vector<1x16xf32>
    %cst_12 = arith.constant dense<0.000000e+00> : vector<64x16xf32>
    %14 = tpu.matmul %11, %12, %cst_12 {dimension_numbers = #tpu.dot_dimension_numbers<[1], [0], [0], [1], [0, 0, 1, 1], [], []>} : vector<64x32xf32>, vector<32x16xf32>, vector<64x16xf32> -> vector<64x16xf32>
    %15 = vector.broadcast %13 : vector<1x16xf32> to vector<64x16xf32>
    %16 = arith.addf %14, %15 : vector<64x16xf32>
    %c0_13 = arith.constant 0 : index
    %c0_14 = arith.constant 0 : index
    %17 = vector.load %arg7[%c0_13, %c0_14] : memref<64x16xf32, #tpu.memory_space<vmem>>, vector<64x16xf32>
    tpu.vector_store %arg7[%c0_13, %c0_14], %16 {strides = array<i32>} : memref<64x16xf32, #tpu.memory_space<vmem>>, vector<64x16xf32>,
    return
  }
  func.func @transform_0(%arg0: i32) -> (i32, i32) {
    %c0_i32 = arith.constant 0 : i32
    %c0_i32_0 = arith.constant 0 : i32
    %c0_i32_1 = arith.constant 0 : i32
    return %c0_i32, %c0_i32_0 : i32, i32
  }
  func.func @transform_1(%arg0: i32) -> (i32, i32) {
    %c0_i32 = arith.constant 0 : i32
    %c0_i32_0 = arith.constant 0 : i32
    return %arg0, %c0_i32 : i32, i32
  }
  func.func @transform_2(%arg0: i32) -> (i32, i32) {
    %c0_i32 = arith.constant 0 : i32
    %c0_i32_0 = arith.constant 0 : i32
    %c0_i32_1 = arith.constant 0 : i32
    return %c0_i32, %c0_i32_0 : i32, i32
  }
  func.func @transform_3(%arg0: i32) -> (i32, i32) {
    %c0_i32 = arith.constant 0 : i32
    %c0_i32_0 = arith.constant 0 : i32
    %c0_i32_1 = arith.constant 0 : i32
    return %c0_i32, %c0_i32_0 : i32, i32
  }
  func.func @transform_4(%arg0: i32) -> (i32, i32) {
    %c0_i32 = arith.constant 0 : i32
    %c0_i32_0 = arith.constant 0 : i32
    %c0_i32_1 = arith.constant 0 : i32
    return %c0_i32, %c0_i32_0 : i32, i32
  }
  func.func @transform_5(%arg0: i32) -> (i32, i32) {
    %c0_i32 = arith.constant 0 : i32
    %c0_i32_0 = arith.constant 0 : i32
    %c0_i32_1 = arith.constant 0 : i32
    return %c0_i32, %c0_i32_0 : i32, i32
  }
  func.func @transform_6(%arg0: i32) -> (i32, i32) {
    %c0_i32 = arith.constant 0 : i32
    %c0_i32_0 = arith.constant 0 : i32
    return %arg0, %c0_i32 : i32, i32
  }
}

</mosaic_0001>

<llo_original>
// kernel: tpu_custom_call.1
$region0: #{tpu_custom_call.1}
  #allocation0 [shape = 'u32[]', space=smem, size = 0x4, offset = 0x4, fixed_abs, tag = 'smem constant byte address 0x4 - core index']
  #allocation1 [shape = 'u32[144,128]{1,0:T(1,128)}', space=vmem, size = 0x12000, scoped, tag = 'internal scratch']
  #allocation2 [shape = 'f32[1,1]{1,0:T(1,128)S(1)}', space=vmem, size = 0x200, scoped, tag = 'scoped memory for tpu_custom_call.1']
  %s0 = inlined_call_operand.<no memory space> [shape: f32[1,1], index: 0, kind: input, shape index: {}]
  %s1 = inlined_call_operand.vmem [shape: f32[64,64], index: 1, kind: input, shape index: {}]
  %s2 = inlined_call_operand.vmem [shape: f32[64,32], index: 2, kind: input, shape index: {}]
  %s3 = inlined_call_operand.vmem [shape: f32[1,32], index: 3, kind: input, shape index: {}]
  %s4 = inlined_call_operand.vmem [shape: f32[32,16], index: 4, kind: input, shape index: {}]
  %s5 = inlined_call_operand.vmem [shape: f32[1,16], index: 5, kind: input, shape index: {}]
  %s6 = inlined_call_operand.vmem [shape: f32[64,16], index: 6, kind: output, shape index: {}]
  %s7 = sld [smem:[#allocation0]]
  $region34: #{tpu_custom_call.1} parent=0
    _
  %s9 = ssub.s32 1, %s7
  %s10 = scalar_select 0, %s9, %s7
  %v11 = vstv %s0
  %12 = vst [vmem:[#allocation2] sm:$0x1] %v11
  // Predicated region
  $region2: #{tpu_custom_call.1} parent=0 // pred_check
    _
  $region3: #{tpu_custom_call.1} parent=0 // pred_check_branch
    %14 = sbr.rel (0) target = $region5
  $region4: #{tpu_custom_call.1} parent=0 // pred_region
    _
  $region5: #{tpu_custom_call.1} parent=0 // pred_fallthru
    _
  // Predicated region
  $region6: #{tpu_custom_call.1} parent=0 // pred_check
    _
  $region7: #{tpu_custom_call.1} parent=0 // pred_check_branch
    %16 = sbr.rel (0) target = $region9
  $region8: #{tpu_custom_call.1} parent=0 // pred_region
    _
  $region9: #{tpu_custom_call.1} parent=0 // pred_fallthru
    _
  // Predicated region
  $region10: #{tpu_custom_call.1} parent=0 // pred_check
    _
  $region11: #{tpu_custom_call.1} parent=0 // pred_check_branch
    %18 = sbr.rel (0) target = $region13
  $region12: #{tpu_custom_call.1} parent=0 // pred_region
    _
  $region13: #{tpu_custom_call.1} parent=0 // pred_fallthru
    _
  // Predicated region
  $region14: #{tpu_custom_call.1} parent=0 // pred_check
    _
  $region15: #{tpu_custom_call.1} parent=0 // pred_check_branch
    %20 = sbr.rel (0) target = $region17
  $region16: #{tpu_custom_call.1} parent=0 // pred_region
    _
  $region17: #{tpu_custom_call.1} parent=0 // pred_fallthru
    _
  // Predicated region
  $region18: #{tpu_custom_call.1} parent=0 // pred_check
    _
  $region19: #{tpu_custom_call.1} parent=0 // pred_check_branch
    %22 = sbr.rel (0) target = $region21
  $region20: #{tpu_custom_call.1} parent=0 // pred_region
    _
  $region21: #{tpu_custom_call.1} parent=0 // pred_fallthru
    _
  // Predicated region
  $region22: #{tpu_custom_call.1} parent=0 // pred_check
    _
  $region23: #{tpu_custom_call.1} parent=0 // pred_check_branch
    %24 = sbr.rel (0) target = $region25
  $region24: #{tpu_custom_call.1} parent=0 // pred_region
    _
  $region25: #{tpu_custom_call.1} parent=0 // pred_fallthru
    _
  %v25 = vld [vmem:[#allocation2] sm:$0x1]
  %v26 = vld [vmem:[%s1] sm:$0xff]
  %v27 = vld [vmem:[%s1 + $0x8] sm:$0xff]
  %v28 = vld [vmem:[%s1 + $0x10] sm:$0xff]
  %v29 = vld [vmem:[%s1 + $0x18] sm:$0xff]
  %v30 = vld [vmem:[%s1 + $0x20] sm:$0xff]
  %v31 = vld [vmem:[%s1 + $0x28] sm:$0xff]
  %v32 = vld [vmem:[%s1 + $0x30] sm:$0xff]
  %v33 = vld [vmem:[%s1 + $0x38] sm:$0xff]
  %v34 = vld [vmem:[%s2] sm:$0xff]
  %v35 = vld [vmem:[%s2 + $0x8] sm:$0xff]
  %v36 = vld [vmem:[%s2 + $0x10] sm:$0xff]
  %v37 = vld [vmem:[%s2 + $0x18] sm:$0xff]
  %v38 = vld [vmem:[%s2 + $0x20] sm:$0xff]
  %v39 = vld [vmem:[%s2 + $0x28] sm:$0xff]
  %v40 = vld [vmem:[%s2 + $0x30] sm:$0xff]
  %v41 = vld [vmem:[%s2 + $0x38] sm:$0xff]
  %v42 = vld [vmem:[%s3] sm:$0x1]
  %v44 = vlaneseq
  %v45 = vshrl.u32 %v44, 7
  %v46 = vsub.s32 0, %v45
  %v47 = vrot.slane %v42, %v46
  %vm49 = vcmask 523264
  %v51 = vsel %vm49, %v26, 0
  %v54 = vsel %vm49, %v27, 0
  %v57 = vsel %vm49, %v28, 0
  %v60 = vsel %vm49, %v29, 0
  %v63 = vsel %vm49, %v30, 0
  %v66 = vsel %vm49, %v31, 0
  %v69 = vsel %vm49, %v32, 0
  %v72 = vsel %vm49, %v33, 0
  %74 = vmatprep.subr.mxu0 0.0
  %75 = vmatpush1.msra.mxu0 %v34
  %76 = vmatprep.subr.mxu0 0.0
  %77 = vmatpush1.msra.mxu0 %v35
  %78 = vmatprep.subr.mxu0 0.0
  %79 = vmatpush1.msra.mxu0 %v36
  %80 = vmatprep.subr.mxu0 0.0
  %81 = vmatpush1.msra.mxu0 %v37
  %82 = vmatprep.subr.mxu0 0.0
  %83 = vmatpush1.msra.mxu0 %v38
  %84 = vmatprep.subr.mxu0 0.0
  %85 = vmatpush1.msra.mxu0 %v39
  %86 = vmatprep.subr.mxu0 0.0
  %87 = vmatpush1.msra.mxu0 %v40
  %88 = vmatprep.subr.mxu0 0.0
  %89 = vmatpush1.msra.mxu0 %v41
  %90 = vmatprep.subr.mxu0 0.0
  %91 = vmatpush1.msra.mxu0 0.0
  %92 = vmatprep.subr.mxu0 0.0
  %93 = vmatpush1.msra.mxu0 0.0
  %94 = vmatprep.subr.mxu0 0.0
  %95 = vmatpush1.msra.mxu0 0.0
  %96 = vmatprep.subr.mxu0 0.0
  %97 = vmatpush1.msra.mxu0 0.0
  %98 = vmatprep.subr.mxu0 0.0
  %99 = vmatpush1.msra.mxu0 0.0
  %100 = vmatprep.subr.mxu0 0.0
  %101 = vmatpush1.msra.mxu0 0.0
  %102 = vmatprep.subr.mxu0 0.0
  %103 = vmatpush1.msra.mxu0 0.0
  %104 = vmatprep.subr.mxu0 0.0
  %105 = vmatpush1.msra.mxu0 0.0
  %106 = vmatprep.subr.mxu0 0.0
  %107 = vmatpush1.msra.mxu0 0.0
  %108 = vmatprep.subr.mxu0 0.0
  %109 = vmatpush1.msra.mxu0 0.0
  %110 = vmatprep.subr.mxu0 0.0
  %111 = vmatpush1.msra.mxu0 0.0
  %112 = vmatprep.subr.mxu0 0.0
  %113 = vmatpush1.msra.mxu0 0.0
  %114 = vmatprep.subr.mxu0 0.0
  %115 = vmatpush1.msra.mxu0 0.0
  %116 = vmatprep.subr.mxu0 0.0
  %117 = vmatpush1.msra.mxu0 0.0
  %118 = vmatprep.subr.mxu0 0.0
  %119 = vmatpush1.msra.mxu0 0.0
  %120 = vmatprep.subr.mxu0 0.0
  %121 = vmatpush1.msra.mxu0 0.0
  %122 = vmatprep.subr.mxu0 0.0
  %123 = vmatpush1.msra.mxu0 0.0
  %124 = vmatprep.subr.mxu0 0.0
  %125 = vmatpush1.msra.mxu0 0.0
  %126 = vmatprep.subr.mxu0 0.0
  %127 = vmatpush1.msra.mxu0 0.0
  %128 = vmatprep.subr.mxu0 0.0
  %129 = vmatpush1.msra.mxu0 0.0
  %130 = vmatprep.subr.mxu0 0.0
  %131 = vmatpush1.msra.mxu0 0.0
  %132 = vmatprep.subr.mxu0 0.0
  %133 = vmatpush1.msra.mxu0 0.0
  %134 = vmatprep.subr.mxu0 0.0
  %135 = vmatpush1.msra.mxu0 0.0
  %136 = vmatprep.subr.mxu0 0.0
  %137 = vmatpush1.msra.mxu0 0.0
  %138 = vmatprep.mubr.f32.mxu0 0.0
  %139 = vmatmul.mubr.f32.gmra.mrb[0].mxu0 %v51
  %v140 = vpop.f32.mrb[0].mxu0
  %v141 = vadd.f32 %v47, %v140
  %v142 = vpop.f32.mrb[0].mxu0
  %143 = vmatprep.mubr.f32.mxu0 0.0
  %144 = vmatmul.mubr.f32.gmra.mrb[0].mxu0 %v54
  %v145 = vpop.f32.mrb[0].mxu0
  %v146 = vadd.f32 %v47, %v145
  %v147 = vpop.f32.mrb[0].mxu0
  %148 = vmatprep.mubr.f32.mxu0 0.0
  %149 = vmatmul.mubr.f32.gmra.mrb[0].mxu0 %v57
  %v150 = vpop.f32.mrb[0].mxu0
  %v151 = vadd.f32 %v47, %v150
  %v152 = vpop.f32.mrb[0].mxu0
  %153 = vmatprep.mubr.f32.mxu0 0.0
  %154 = vmatmul.mubr.f32.gmra.mrb[0].mxu0 %v60
  %v155 = vpop.f32.mrb[0].mxu0
  %v156 = vadd.f32 %v47, %v155
  %v157 = vpop.f32.mrb[0].mxu0
  %158 = vmatprep.mubr.f32.mxu0 0.0
  %159 = vmatmul.mubr.f32.gmra.mrb[0].mxu0 %v63
  %v160 = vpop.f32.mrb[0].mxu0
  %v161 = vadd.f32 %v47, %v160
  %v162 = vpop.f32.mrb[0].mxu0
  %163 = vmatprep.mubr.f32.mxu0 0.0
  %164 = vmatmul.mubr.f32.gmra.mrb[0].mxu0 %v66
  %v165 = vpop.f32.mrb[0].mxu0
  %v166 = vadd.f32 %v47, %v165
  %v167 = vpop.f32.mrb[0].mxu0
  %168 = vmatprep.mubr.f32.mxu0 0.0
  %169 = vmatmul.mubr.f32.gmra.mrb[0].mxu0 %v69
  %v170 = vpop.f32.mrb[0].mxu0
  %v171 = vadd.f32 %v47, %v170
  %v172 = vpop.f32.mrb[0].mxu0
  %173 = vmatprep.mubr.f32.mxu0 0.0
  %174 = vmatmul.mubr.f32.gmra.mrb[0].mxu0 %v72
  %v175 = vpop.f32.mrb[0].mxu0
  %v176 = vadd.f32 %v47, %v175
  %v177 = vpop.f32.mrb[0].mxu0
  %178 = vdwg.mxu0
  %vm179 = vcmp.gt.f32.partialorder %v141, 0.0
  %vm180 = vcmp.gt.f32.partialorder %v146, 0.0
  %vm181 = vcmp.gt.f32.partialorder %v151, 0.0
  %vm182 = vcmp.gt.f32.partialorder %v156, 0.0
  %vm183 = vcmp.gt.f32.partialorder %v161, 0.0
  %vm184 = vcmp.gt.f32.partialorder %v166, 0.0
  %vm185 = vcmp.gt.f32.partialorder %v171, 0.0
  %vm186 = vcmp.gt.f32.partialorder %v176, 0.0
  %v188 = vlaneseq
  %v189 = vshrl.u32 %v188, 7
  %v190 = vsub.s32 0, %v189
  %v191 = vrot.slane %v25, %v190
  %192 = vset.pattern.permute.xlu0 0
  %193 = vperm.xlu0 %192, %v191
  %v194 = vpop.permute.xlu0 %193
  %v196 = vmul.f32 %v194, %v141
  %v197 = vmul.f32 %v194, %v146
  %v198 = vmul.f32 %v194, %v151
  %v199 = vmul.f32 %v194, %v156
  %v200 = vmul.f32 %v194, %v161
  %v201 = vmul.f32 %v194, %v166
  %v202 = vmul.f32 %v194, %v171
  %v203 = vmul.f32 %v194, %v176
  %v204 = vsel %vm179, %v141, %v196
  %v205 = vsel %vm180, %v146, %v197
  %v206 = vsel %vm181, %v151, %v198
  %v207 = vsel %vm182, %v156, %v199
  %v208 = vsel %vm183, %v161, %v200
  %v209 = vsel %vm184, %v166, %v201
  %v210 = vsel %vm185, %v171, %v202
  %v211 = vsel %vm186, %v176, %v203
  %v212 = vld [vmem:[%s4] sm:$0xff]
  %v213 = vld [vmem:[%s4 + $0x8] sm:$0xff]
  %v214 = vld [vmem:[%s4 + $0x10] sm:$0xff]
  %v215 = vld [vmem:[%s4 + $0x18] sm:$0xff]
  %v216 = vld [vmem:[%s5] sm:$0x1]
  %v218 = vlaneseq
  %v219 = vshrl.u32 %v218, 7
  %v220 = vsub.s32 0, %v219
  %v221 = vrot.slane %v216, %v220
  %vm223 = vcmask 261120
  %v225 = vsel %vm223, %v204, 0
  %v228 = vsel %vm223, %v205, 0
  %v231 = vsel %vm223, %v206, 0
  %v234 = vsel %vm223, %v207, 0
  %v237 = vsel %vm223, %v208, 0
  %v240 = vsel %vm223, %v209, 0
  %v243 = vsel %vm223, %v210, 0
  %v246 = vsel %vm223, %v211, 0
  %248 = vmatprep.subr.mxu0 0.0
  %249 = vmatpush1.msra.mxu0 %v212
  %250 = vmatprep.subr.mxu0 0.0
  %251 = vmatpush1.msra.mxu0 %v213
  %252 = vmatprep.subr.mxu0 0.0
  %253 = vmatpush1.msra.mxu0 %v214
  %254 = vmatprep.subr.mxu0 0.0
  %255 = vmatpush1.msra.mxu0 %v215
  %256 = vmatprep.subr.mxu0 0.0
  %257 = vmatpush1.msra.mxu0 0.0
  %258 = vmatprep.subr.mxu0 0.0
  %259 = vmatpush1.msra.mxu0 0.0
  %260 = vmatprep.subr.mxu0 0.0
  %261 = vmatpush1.msra.mxu0 0.0
  %262 = vmatprep.subr.mxu0 0.0
  %263 = vmatpush1.msra.mxu0 0.0
  %264 = vmatprep.subr.mxu0 0.0
  %265 = vmatpush1.msra.mxu0 0.0
  %266 = vmatprep.subr.mxu0 0.0
  %267 = vmatpush1.msra.mxu0 0.0
  %268 = vmatprep.subr.mxu0 0.0
  %269 = vmatpush1.msra.mxu0 0.0
  %270 = vmatprep.subr.mxu0 0.0
  %271 = vmatpush1.msra.mxu0 0.0
  %272 = vmatprep.subr.mxu0 0.0
  %273 = vmatpush1.msra.mxu0 0.0
  %274 = vmatprep.subr.mxu0 0.0
  %275 = vmatpush1.msra.mxu0 0.0
  %276 = vmatprep.subr.mxu0 0.0
  %277 = vmatpush1.msra.mxu0 0.0
  %278 = vmatprep.subr.mxu0 0.0
  %279 = vmatpush1.msra.mxu0 0.0
  %280 = vmatprep.subr.mxu0 0.0
  %281 = vmatpush1.msra.mxu0 0.0
  %282 = vmatprep.subr.mxu0 0.0
  %283 = vmatpush1.msra.mxu0 0.0
  %284 = vmatprep.subr.mxu0 0.0
  %285 = vmatpush1.msra.mxu0 0.0
  %286 = vmatprep.subr.mxu0 0.0
  %287 = vmatpush1.msra.mxu0 0.0
  %288 = vmatprep.subr.mxu0 0.0
  %289 = vmatpush1.msra.mxu0 0.0
  %290 = vmatprep.subr.mxu0 0.0
  %291 = vmatpush1.msra.mxu0 0.0
  %292 = vmatprep.subr.mxu0 0.0
  %293 = vmatpush1.msra.mxu0 0.0
  %294 = vmatprep.subr.mxu0 0.0
  %295 = vmatpush1.msra.mxu0 0.0
  %296 = vmatprep.subr.mxu0 0.0
  %297 = vmatpush1.msra.mxu0 0.0
  %298 = vmatprep.subr.mxu0 0.0
  %299 = vmatpush1.msra.mxu0 0.0
  %300 = vmatprep.subr.mxu0 0.0
  %301 = vmatpush1.msra.mxu0 0.0
  %302 = vmatprep.subr.mxu0 0.0
  %303 = vmatpush1.msra.mxu0 0.0
  %304 = vmatprep.subr.mxu0 0.0
  %305 = vmatpush1.msra.mxu0 0.0
  %306 = vmatprep.subr.mxu0 0.0
  %307 = vmatpush1.msra.mxu0 0.0
  %308 = vmatprep.subr.mxu0 0.0
  %309 = vmatpush1.msra.mxu0 0.0
  %310 = vmatprep.subr.mxu0 0.0
  %311 = vmatpush1.msra.mxu0 0.0
  %312 = vmatprep.mubr.f32.mxu0 0.0
  %313 = vmatmul.mubr.f32.gmra.mrb[0].mxu0 %v225
  %v314 = vpop.f32.mrb[0].mxu0
  %v315 = vadd.f32 %v221, %v314
  %v316 = vpop.f32.mrb[0].mxu0
  %317 = vmatprep.mubr.f32.mxu0 0.0
  %318 = vmatmul.mubr.f32.gmra.mrb[0].mxu0 %v228
  %v319 = vpop.f32.mrb[0].mxu0
  %v320 = vadd.f32 %v221, %v319
  %v321 = vpop.f32.mrb[0].mxu0
  %322 = vmatprep.mubr.f32.mxu0 0.0
  %323 = vmatmul.mubr.f32.gmra.mrb[0].mxu0 %v231
  %v324 = vpop.f32.mrb[0].mxu0
  %v325 = vadd.f32 %v221, %v324
  %v326 = vpop.f32.mrb[0].mxu0
  %327 = vmatprep.mubr.f32.mxu0 0.0
  %328 = vmatmul.mubr.f32.gmra.mrb[0].mxu0 %v234
  %v329 = vpop.f32.mrb[0].mxu0
  %v330 = vadd.f32 %v221, %v329
  %v331 = vpop.f32.mrb[0].mxu0
  %332 = vmatprep.mubr.f32.mxu0 0.0
  %333 = vmatmul.mubr.f32.gmra.mrb[0].mxu0 %v237
  %v334 = vpop.f32.mrb[0].mxu0
  %v335 = vadd.f32 %v221, %v334
  %v336 = vpop.f32.mrb[0].mxu0
  %337 = vmatprep.mubr.f32.mxu0 0.0
  %338 = vmatmul.mubr.f32.gmra.mrb[0].mxu0 %v240
  %v339 = vpop.f32.mrb[0].mxu0
  %v340 = vadd.f32 %v221, %v339
  %v341 = vpop.f32.mrb[0].mxu0
  %342 = vmatprep.mubr.f32.mxu0 0.0
  %343 = vmatmul.mubr.f32.gmra.mrb[0].mxu0 %v243
  %v344 = vpop.f32.mrb[0].mxu0
  %v345 = vadd.f32 %v221, %v344
  %v346 = vpop.f32.mrb[0].mxu0
  %347 = vmatprep.mubr.f32.mxu0 0.0
  %348 = vmatmul.mubr.f32.gmra.mrb[0].mxu0 %v246
  %v349 = vpop.f32.mrb[0].mxu0
  %v350 = vadd.f32 %v221, %v349
  %v351 = vpop.f32.mrb[0].mxu0
  %352 = vdwg.mxu0
  %vm353 = vcmask 130048
  %354 = vst.msk [vmem:[%s6] sm:$0xff] %vm353, %v315
  %355 = vst.msk [vmem:[%s6 + $0x8] sm:$0xff] %vm353, %v320
  %356 = vst.msk [vmem:[%s6 + $0x10] sm:$0xff] %vm353, %v325
  %357 = vst.msk [vmem:[%s6 + $0x18] sm:$0xff] %vm353, %v330
  %358 = vst.msk [vmem:[%s6 + $0x20] sm:$0xff] %vm353, %v335
  %359 = vst.msk [vmem:[%s6 + $0x28] sm:$0xff] %vm353, %v340
  %360 = vst.msk [vmem:[%s6 + $0x30] sm:$0xff] %vm353, %v345
  %361 = vst.msk [vmem:[%s6 + $0x38] sm:$0xff] %vm353, %v350
  // Predicated region
  $region26: #{tpu_custom_call.1} parent=0 // pred_check
    _
  $region27: #{tpu_custom_call.1} parent=0 // pred_check_branch
    %363 = sbr.rel (0) target = $region29
  $region28: #{tpu_custom_call.1} parent=0 // pred_region
    _
  $region29: #{tpu_custom_call.1} parent=0 // pred_fallthru
    _
  // Predicated region
  $region30: #{tpu_custom_call.1} parent=0 // pred_check
    _
  $region31: #{tpu_custom_call.1} parent=0 // pred_check_branch
    %365 = sbr.rel (0) target = $region33
  $region32: #{tpu_custom_call.1} parent=0 // pred_region
    _
  $region33: #{tpu_custom_call.1} parent=0 // pred_fallthru
    _

</llo_original>
